<compile_context>
chip_gen: v7x
topology: tpu7x:2x2x1
jax: 0.10.0
libtpu: 0.0.40
codegen_flags: <defaults>
</compile_context>

<pallas_src>
import functools

import jax
import jax.numpy as jnp
from jax.experimental import pallas as pl
from jax.experimental.pallas import tpu as pltpu


def _round_up(x, m):
    return (x + m - 1) // m * m


def encoder_kernel(x_ref, w1t_ref, b1_ref, w2t_ref, b2_ref, y_ref, acc_ref):
    """K-tiled linear1 accumulation; finalize = bias -> tanh -> linear2 -> store."""
    k = pl.program_id(1)

    @pl.when(k == 0)
    def _():
        acc_ref[...] = jnp.zeros_like(acc_ref)

    # Partial first matmul on this K tile (bf16 x bf16 inputs, f32 MXU accumulation).
    acc_ref[...] += jnp.dot(
        x_ref[...], w1t_ref[...], preferred_element_type=jnp.float32
    )

    @pl.when(k == pl.num_programs(1) - 1)
    def _():
        h = jnp.tanh(acc_ref[...] + b1_ref[...])                     # (tm, D1p) f32
        # Second matmul: bf16 x bf16 single MXU pass, f32 accumulation.
        y = jnp.dot(
            h.astype(w2t_ref.dtype), w2t_ref[...],
            preferred_element_type=jnp.float32,
        )
        y = y + b2_ref[...]                                          # (tm, 2*D2)
        y_ref[...] = y.astype(y_ref.dtype)


def prepare_params(w1, b1, w2, b2, *, block_k=2048, weight_dtype=jnp.bfloat16):
    """One-time (init-time) param prep: transpose, bf16 cast, zero-pad K and D1.

    Hoisted out of the per-call jit path so no (20k x 600) transpose/cast is
    materialized on every forward.  D1 is padded to a multiple of 128 so the
    accumulator / matmul-2 K dim are lane-dense; padded columns of W1^T and b1
    and padded rows of W2^T are zero, so they contribute tanh(0)*0 = 0.
    """
    D1, D0 = w1.shape
    D2x2 = w2.shape[0]
    D0p = _round_up(D0, block_k)
    D1p = _round_up(D1, 128)

    w1t = (
        jnp.zeros((D0p, D1p), weight_dtype)
        .at[:D0, :D1]
        .set(w1.T.astype(weight_dtype))
    )
    w2t = (
        jnp.zeros((D1p, D2x2), weight_dtype)
        .at[:D1, :]
        .set(w2.T.astype(weight_dtype))
    )
    b1r = jnp.zeros((1, D1p), jnp.float32).at[0, :D1].set(b1.astype(jnp.float32))
    b2r = b2.reshape(1, D2x2).astype(jnp.float32)
    return w1t, b1r, w2t, b2r


@functools.partial(jax.jit, static_argnames=("block_b", "block_k"))
def encoder_forward(x, w1t, b1r, w2t, b2r, *, block_b=256, block_k=2048):
    """x: (B, D0) f32; w1t: (D0p, D1p) bf16; w2t: (D1p, 2*D2) bf16; biases (1, .) f32."""
    B, D0 = x.shape
    D0p, D1p = w1t.shape
    D2x2 = w2t.shape[1]
    D2 = D2x2 // 2

    # Tile sizes.  Batch tile is a multiple of 16 (bf16 sublane packing); the
    # K tile equals block_k (w1t was padded to a multiple of it at init time).
    tm = min(block_b, _round_up(B, 16))
    tk = min(block_k, D0p)
    assert D0p % tk == 0, "w1t must be K-padded to a multiple of block_k"

    Bp = _round_up(B, tm)

    # Fused pad + bf16 cast of the activations (halves x HBM traffic and the
    # (tm, tk) double-buffer VMEM; removes per-tile casts from the hot loop).
    if Bp != B or D0p != D0:
        x_p = (
            jnp.zeros((Bp, D0p), jnp.bfloat16)
            .at[:B, :D0]
            .set(x.astype(jnp.bfloat16))
        )
    else:
        x_p = x.astype(jnp.bfloat16)

    grid = (Bp // tm, D0p // tk)
    n_btiles = Bp // tm

    cost = pl.CostEstimate(
        flops=2 * Bp * D0p * D1p + 2 * Bp * D1p * D2x2,
        transcendentals=Bp * D1p,
        bytes_accessed=(
            Bp * D0p * 2                       # x (bf16), read once
            + n_btiles * D0p * D1p * 2         # W1^T (bf16), re-streamed per batch tile
            + D1p * D2x2 * 2                   # W2^T (bf16)
            + (D1p + D2x2) * 4                 # biases (f32)
            + Bp * D2x2 * 4                    # y (f32)
        ),
    )

    y = pl.pallas_call(
        encoder_kernel,
        out_shape=jax.ShapeDtypeStruct((Bp, D2x2), jnp.float32),
        grid_spec=pltpu.PrefetchScalarGridSpec(
            num_scalar_prefetch=0,
            grid=grid,
            in_specs=[
                pl.BlockSpec((tm, tk), lambda i, k: (i, k)),       # x tile (bf16)
                pl.BlockSpec((tk, D1p), lambda i, k: (k, 0)),      # W1^T K-tile (bf16)
                pl.BlockSpec((1, D1p), lambda i, k: (0, 0)),       # b1 (resident)
                pl.BlockSpec((D1p, D2x2), lambda i, k: (0, 0)),    # W2^T (resident, bf16)
                pl.BlockSpec((1, D2x2), lambda i, k: (0, 0)),      # b2 (resident)
            ],
            out_specs=pl.BlockSpec((tm, D2x2), lambda i, k: (i, 0)),  # fused y
            scratch_shapes=[pltpu.VMEM((tm, D1p), jnp.float32)],      # h accumulator
        ),
        compiler_params=pltpu.CompilerParams(
            dimension_semantics=("parallel", "arbitrary"),
            vmem_limit_bytes=48 * 1024 * 1024,
        ),
        cost_estimate=cost,
    )(x_p, w1t, b1r, w2t, b2r)

    y = y[:B]
    # torch.chunk(x, 2, dim=1) — free slice in the wrapper.
    return y[:, :D2], y[:, D2:]


def xavier_uniform(key, out_features, in_features, dtype=jnp.float32):
    # Matches torch.nn.init.xavier_uniform_ for a (out, in) Linear weight.
    limit = (6.0 / (in_features + out_features)) ** 0.5
    return jax.random.uniform(
        key, (out_features, in_features), dtype=dtype, minval=-limit, maxval=limit
    )


if __name__ == "__main__":
    # Small shapes consistent with the module's forward (scaled-down q_dims).
    q_dims = [1024, 256, 128]      # original: [20108, 600, 200]
    batch = 160                    # not a tile multiple -> exercises batch padding
    block_b = 64                   # -> 3 batch tiles (exercises 'parallel' axis)
    block_k = 256                  # -> 4 K tiles (exercises the accumulator path)

    key = jax.random.PRNGKey(0)
    kx, kw1, kb1, kw2, kb2 = jax.random.split(key, 5)

    x = jax.random.normal(kx, (batch, q_dims[0]), dtype=jnp.float32)

    # Deterministic parameter init mirroring the module's __init__:
    #   xavier_uniform_ on weights, bias ~ N(0, 0.001).
    w1 = xavier_uniform(kw1, q_dims[1], q_dims[0])
    b1 = 0.001 * jax.random.normal(kb1, (q_dims[1],), dtype=jnp.float32)
    w2 = xavier_uniform(kw2, q_dims[2] * 2, q_dims[1])
    b2 = 0.001 * jax.random.normal(kb2, (q_dims[2] * 2,), dtype=jnp.float32)

    # One-time weight prep (transpose + bf16 cast + K/D1 pad), outside the jit path.
    w1t, b1r, w2t, b2r = prepare_params(w1, b1, w2, b2, block_k=block_k)

    mu, logvar = encoder_forward(x, w1t, b1r, w2t, b2r,
                                 block_b=block_b, block_k=block_k)
    jax.block_until_ready((mu, logvar))

    # Pure-JAX reference (eval-mode dropout = identity), applying the same bf16
    # roundings the kernel uses so only accumulation-order noise remains.
    x_b = x.astype(jnp.bfloat16).astype(jnp.float32)
    w1_b = w1.astype(jnp.bfloat16).astype(jnp.float32)
    h_ref = jnp.tanh(x_b @ w1_b.T + b1)
    h_b = h_ref.astype(jnp.bfloat16).astype(jnp.float32)
    w2_b = w2.astype(jnp.bfloat16).astype(jnp.float32)
    y_ref = h_b @ w2_b.T + b2
    mu_ref, logvar_ref = y_ref[:, : q_dims[2]], y_ref[:, q_dims[2] :]

    assert mu.shape == (batch, q_dims[2]) and logvar.shape == (batch, q_dims[2])
    assert jnp.allclose(mu, mu_ref, atol=2e-2, rtol=2e-2)
    assert jnp.allclose(logvar, logvar_ref, atol=2e-2, rtol=2e-2)

    print("KERNEL_OK")
</pallas_src>

<mosaic_0001>
module attributes {stable_mosaic.version = 11 : i64} {
  func.func @encoder_kernel(%arg0: i32, %arg1: i32, %arg2: memref<64x256xbf16, #tpu.memory_space<vmem>>, %arg3: memref<256x256xbf16, #tpu.memory_space<vmem>>, %arg4: memref<1x256xf32, #tpu.memory_space<vmem>>, %arg5: memref<256x256xbf16, #tpu.memory_space<vmem>>, %arg6: memref<1x256xf32, #tpu.memory_space<vmem>>, %arg7: memref<64x256xf32, #tpu.memory_space<vmem>>, %arg8: memref<64x256xf32, #tpu.memory_space<vmem>>) attributes {dimension_semantics = [#tpu.dimension_semantics<parallel>, #tpu.dimension_semantics<arbitrary>], iteration_bounds = array<i64: 3, 4>, scalar_prefetch = 0 : i64, scratch_operands = 1 : i64, tpu.core_type = #tpu.core_type<tc>, window_params = [{transform_indices = @transform_0, window_bounds = array<i64: 64, 256>}, {transform_indices = @transform_1, window_bounds = array<i64: 256, 256>}, {pipeline_mode = #tpu.pipeline_mode<synchronous>, transform_indices = @transform_2, window_bounds = array<i64: 1, 256>}, {pipeline_mode = #tpu.pipeline_mode<synchronous>, transform_indices = @transform_3, window_bounds = array<i64: 256, 256>}, {pipeline_mode = #tpu.pipeline_mode<synchronous>, transform_indices = @transform_4, window_bounds = array<i64: 1, 256>}, {transform_indices = @transform_5, window_bounds = array<i64: 64, 256>}]} {
    %c0_i32 = arith.constant 0 : i32
    %0 = arith.cmpi eq, %arg1, %c0_i32 : i32
    %1 = arith.extui %0 : i1 to i32
    %c0_i32_0 = arith.constant 0 : i32
    %2 = arith.cmpi ne, %1, %c0_i32_0 : i32
    scf.if %2 {
      %cst_9 = arith.constant 0.000000e+00 : f32
      %12 = vector.broadcast %cst_9 : f32 to vector<64x256xf32>
      %c0_10 = arith.constant 0 : index
      %c0_11 = arith.constant 0 : index
      %13 = vector.load %arg8[%c0_10, %c0_11] : memref<64x256xf32, #tpu.memory_space<vmem>>, vector<64x256xf32>
      tpu.vector_store %arg8[%c0_10, %c0_11], %12 {strides = array<i32>} : memref<64x256xf32, #tpu.memory_space<vmem>>, vector<64x256xf32>,
    } else {
    }
    %c0 = arith.constant 0 : index
    %c0_1 = arith.constant 0 : index
    %3 = vector.load %arg8[%c0, %c0_1] : memref<64x256xf32, #tpu.memory_space<vmem>>, vector<64x256xf32>
    %c0_2 = arith.constant 0 : index
    %c0_3 = arith.constant 0 : index
    %4 = vector.load %arg2[%c0_2, %c0_3] : memref<64x256xbf16, #tpu.memory_space<vmem>>, vector<64x256xbf16>
    %c0_4 = arith.constant 0 : index
    %c0_5 = arith.constant 0 : index
    %5 = vector.load %arg3[%c0_4, %c0_5] : memref<256x256xbf16, #tpu.memory_space<vmem>>, vector<256x256xbf16>
    %cst = arith.constant dense<0.000000e+00> : vector<64x256xf32>
    %6 = tpu.matmul %4, %5, %cst {dimension_numbers = #tpu.dot_dimension_numbers<[1], [0], [0], [1], [0, 0, 1, 1], [], []>} : vector<64x256xbf16>, vector<256x256xbf16>, vector<64x256xf32> -> vector<64x256xf32>
    %7 = arith.addf %3, %6 : vector<64x256xf32>
    %c0_6 = arith.constant 0 : index
    %c0_7 = arith.constant 0 : index
    %8 = vector.load %arg8[%c0_6, %c0_7] : memref<64x256xf32, #tpu.memory_space<vmem>>, vector<64x256xf32>
    tpu.vector_store %arg8[%c0_6, %c0_7], %7 {strides = array<i32>} : memref<64x256xf32, #tpu.memory_space<vmem>>, vector<64x256xf32>,
    %c3_i32 = arith.constant 3 : i32
    %9 = arith.cmpi eq, %arg1, %c3_i32 : i32
    %10 = arith.extui %9 : i1 to i32
    %c0_i32_8 = arith.constant 0 : i32
    %11 = arith.cmpi ne, %10, %c0_i32_8 : i32
    scf.if %11 {
      %c0_9 = arith.constant 0 : index
      %c0_10 = arith.constant 0 : index
      %12 = vector.load %arg8[%c0_9, %c0_10] : memref<64x256xf32, #tpu.memory_space<vmem>>, vector<64x256xf32>
      %c0_11 = arith.constant 0 : index
      %c0_12 = arith.constant 0 : index
      %13 = vector.load %arg4[%c0_11, %c0_12] : memref<1x256xf32, #tpu.memory_space<vmem>>, vector<1x256xf32>
      %14 = vector.broadcast %13 : vector<1x256xf32> to vector<64x256xf32>
      %15 = arith.addf %12, %14 : vector<64x256xf32>
      %16 = math.tanh %15 : vector<64x256xf32>
      %17 = arith.truncf %16 : vector<64x256xf32> to vector<64x256xbf16>
      %c0_13 = arith.constant 0 : index
      %c0_14 = arith.constant 0 : index
      %18 = vector.load %arg5[%c0_13, %c0_14] : memref<256x256xbf16, #tpu.memory_space<vmem>>, vector<256x256xbf16>
      %cst_15 = arith.constant dense<0.000000e+00> : vector<64x256xf32>
      %19 = tpu.matmul %17, %18, %cst_15 {dimension_numbers = #tpu.dot_dimension_numbers<[1], [0], [0], [1], [0, 0, 1, 1], [], []>} : vector<64x256xbf16>, vector<256x256xbf16>, vector<64x256xf32> -> vector<64x256xf32>
      %c0_16 = arith.constant 0 : index
      %c0_17 = arith.constant 0 : index
      %20 = vector.load %arg6[%c0_16, %c0_17] : memref<1x256xf32, #tpu.memory_space<vmem>>, vector<1x256xf32>
      %21 = vector.broadcast %20 : vector<1x256xf32> to vector<64x256xf32>
      %22 = arith.addf %19, %21 : vector<64x256xf32>
      %c0_18 = arith.constant 0 : index
      %c0_19 = arith.constant 0 : index
      %23 = vector.load %arg7[%c0_18, %c0_19] : memref<64x256xf32, #tpu.memory_space<vmem>>, vector<64x256xf32>
      tpu.vector_store %arg7[%c0_18, %c0_19], %22 {strides = array<i32>} : memref<64x256xf32, #tpu.memory_space<vmem>>, vector<64x256xf32>,
    } else {
    }
    return
  }
  func.func @transform_0(%arg0: i32, %arg1: i32) -> (i32, i32) {
    %c0_i32 = arith.constant 0 : i32
    return %arg0, %arg1 : i32, i32
  }
  func.func @transform_1(%arg0: i32, %arg1: i32) -> (i32, i32) {
    %c0_i32 = arith.constant 0 : i32
    %c0_i32_0 = arith.constant 0 : i32
    return %arg1, %c0_i32 : i32, i32
  }
  func.func @transform_2(%arg0: i32, %arg1: i32) -> (i32, i32) {
    %c0_i32 = arith.constant 0 : i32
    %c0_i32_0 = arith.constant 0 : i32
    %c0_i32_1 = arith.constant 0 : i32
    return %c0_i32, %c0_i32_0 : i32, i32
  }
  func.func @transform_3(%arg0: i32, %arg1: i32) -> (i32, i32) {
    %c0_i32 = arith.constant 0 : i32
    %c0_i32_0 = arith.constant 0 : i32
    %c0_i32_1 = arith.constant 0 : i32
    return %c0_i32, %c0_i32_0 : i32, i32
  }
  func.func @transform_4(%arg0: i32, %arg1: i32) -> (i32, i32) {
    %c0_i32 = arith.constant 0 : i32
    %c0_i32_0 = arith.constant 0 : i32
    %c0_i32_1 = arith.constant 0 : i32
    return %c0_i32, %c0_i32_0 : i32, i32
  }
  func.func @transform_5(%arg0: i32, %arg1: i32) -> (i32, i32) {
    %c0_i32 = arith.constant 0 : i32
    %c0_i32_0 = arith.constant 0 : i32
    return %arg0, %c0_i32 : i32, i32
  }
}

</mosaic_0001>

<llo_original>
// kernel: encoder_forward.1
$region0: #{encoder_forward.1}
  #allocation0 [shape = 'u32[]', space=smem, size = 0x4, offset = 0x4, fixed_abs, tag = 'smem constant byte address 0x4 - core index']
  #allocation1 [shape = 'u32[144,128]{1,0:T(1,128)}', space=vmem, size = 0x12000, scoped, tag = 'internal scratch']
  #allocation2 [shape = 'f32[64,256]{1,0:T(8,128)}', space=vmem, size = 0x10000, scoped, tag = 'scratch operand']
  %s0 = inlined_call_operand.vmem [shape: bf16[192,1024], index: 0, kind: input, shape index: {}]
  %s1 = inlined_call_operand.vmem [shape: bf16[1024,256], index: 1, kind: input, shape index: {}]
  %s2 = inlined_call_operand.vmem [shape: f32[1,256], index: 2, kind: input, shape index: {}]
  %s3 = inlined_call_operand.vmem [shape: bf16[256,256], index: 3, kind: input, shape index: {}]
  %s4 = inlined_call_operand.vmem [shape: f32[1,256], index: 4, kind: input, shape index: {}]
  %s5 = inlined_call_operand.vmem [shape: f32[192,256], index: 5, kind: output, shape index: {}]
  %s6 = sld [smem:[#allocation0]]
  $region99: #{encoder_forward.1} parent=0
    _
  %s8 = ssub.s32 1, %s6
  %s9 = scalar_select 0, %s8, %s6
  $region1: #{encoder_forward.1} parent=0
    #allocation3 [shape = 'u8[65536]{0}', space=vmem, size = 0x10000, scoped, tag = 'input window, operand 0']
    loop: start=0, step=1, limit=14
    $region2: #{encoder_forward.1} parent=1 // loop_pre_header
      _
    $region3: #{encoder_forward.1} parent=1 // loop_header
      %s11 = sphi 0, %s15
      %p12 = scmp.ge.s32.totalorder %s11, 14
      %s18 = sphi 0, %s30
      %s19 = sphi 0, %s26
      %s20 = sphi 0, %s18
      %s21 = sphi 0, %s19
      %s22 = sphi 0, %s20
      %s23 = sphi 0, %s21
      %s35 = sphi 0, %s37
      %s38 = sphi 0, %s35
      %s39 = sphi 0, %s38
      %s55 = sphi 0, %s39
      %s61 = sphi 0, %s63
      %s64 = sphi 0, %s61
      %s65 = sphi 0, %s64
      %s81 = sphi 0, %s65
      %s85 = sphi 0, %s85
      %s87 = sphi 0, %s85
      %s88 = sphi 0, %s87
      %s102 = sphi 0, %s88
      %s106 = sphi 0, %s106
      %s108 = sphi 0, %s106
      %s109 = sphi 0, %s108
      %s123 = sphi 0, %s109
      %s127 = sphi 0, %s127
      %s129 = sphi 0, %s127
      %s130 = sphi 0, %s129
      %s144 = sphi 0, %s130
      %s150 = sphi 0, %s152
      %s153 = sphi 0, %s150
      %s154 = sphi 0, %s153
      %s170 = sphi 0, %s154
    $region4: #{encoder_forward.1} parent=1 // loop_header_branch
      %14 = sbr.rel (%p12) target = $region8
    $region5: #{encoder_forward.1} parent=1 // loop_body
      %s16 = ssub.s32 %s11, 1
      %s17 = ssub.s32 %s11, 2
      %s24 = sadd.s32 1, %s19
      %p25 = scmp.ge.s32.totalorder %s24, 4
      %s26 = scalar_select %p25, 0, %s24
      %s27 = sadd.s32 1, %s18
      %s28 = scalar_select %p25, %s27, %s18
      %p29 = scmp.ge.s32.totalorder %s28, 3
      %s30 = scalar_select %p29, 0, %s28
      %s31 = ssub.s32 %s18, %s30
      %s32 = ssub.s32 %s19, %s26
      %s33 = sor.u32 %s31, %s32
      %p34 = scmp.eq.s32.totalorder %s33, 0
      %s36 = sadd.s32 %s35, 1
      %s37 = scalar_select %p34, %s35, %s36
      %p40 = pneg %p34
      %p41 = scmp.eq.s32.totalorder %s11, 11
      %p42 = por %p40, %p41
      %p43 = scmp.ne.s32.totalorder %s35, %s38
      %p44 = scmp.eq.s32.totalorder %s11, 0
      %p45 = por %p43, %p44
      %p46 = scmp.ne.s32.totalorder %s35, %s38
      %p47 = scmp.eq.s32.totalorder %s16, 11
      %p48 = por %p46, %p47
      %p49 = scmp.ne.s32.totalorder %s38, %s39
      %p50 = scmp.eq.s32.totalorder %s16, 0
      %p51 = por %p49, %p50
      %p52 = scmp.ne.s32.totalorder %s38, %s39
      %p53 = scmp.eq.s32.totalorder %s17, 11
      %p54 = por %p52, %p53
      %p56 = scmp.ne.s32.totalorder %s39, %s55
      %p57 = scmp.eq.s32.totalorder %s17, 0
      %p58 = por %p56, %p57
      %s59 = ssub.s32 %s19, %s26
      %p60 = scmp.eq.s32.totalorder %s59, 0
      %s62 = sadd.s32 %s61, 1
      %s63 = scalar_select %p60, %s61, %s62
      %p66 = pneg %p60
      %p67 = scmp.eq.s32.totalorder %s11, 11
      %p68 = por %p66, %p67
      %p69 = scmp.ne.s32.totalorder %s61, %s64
      %p70 = scmp.eq.s32.totalorder %s11, 0
      %p71 = por %p69, %p70
      %p72 = scmp.ne.s32.totalorder %s61, %s64
      %p73 = scmp.eq.s32.totalorder %s16, 11
      %p74 = por %p72, %p73
      %p75 = scmp.ne.s32.totalorder %s64, %s65
      %p76 = scmp.eq.s32.totalorder %s16, 0
      %p77 = por %p75, %p76
      %p78 = scmp.ne.s32.totalorder %s64, %s65
      %p79 = scmp.eq.s32.totalorder %s17, 11
      %p80 = por %p78, %p79
      %p82 = scmp.ne.s32.totalorder %s65, %s81
      %p83 = scmp.eq.s32.totalorder %s17, 0
      %p84 = por %p82, %p83
      %s86 = sadd.s32 %s85, 1
      %p89 = scmp.eq.s32.totalorder %s11, 11
      %p90 = scmp.ne.s32.totalorder %s85, %s87
      %p91 = scmp.eq.s32.totalorder %s11, 0
      %p92 = por %p90, %p91
      %p93 = scmp.ne.s32.totalorder %s85, %s87
      %p94 = scmp.eq.s32.totalorder %s16, 11
      %p95 = por %p93, %p94
      %p96 = scmp.ne.s32.totalorder %s87, %s88
      %p97 = scmp.eq.s32.totalorder %s16, 0
      %p98 = por %p96, %p97
      %p99 = scmp.ne.s32.totalorder %s87, %s88
      %p100 = scmp.eq.s32.totalorder %s17, 11
      %p101 = por %p99, %p100
      %p103 = scmp.ne.s32.totalorder %s88, %s102
      %p104 = scmp.eq.s32.totalorder %s17, 0
      %p105 = por %p103, %p104
      %s107 = sadd.s32 %s106, 1
      %p110 = scmp.eq.s32.totalorder %s11, 11
      %p111 = scmp.ne.s32.totalorder %s106, %s108
      %p112 = scmp.eq.s32.totalorder %s11, 0
      %p113 = por %p111, %p112
      %p114 = scmp.ne.s32.totalorder %s106, %s108
      %p115 = scmp.eq.s32.totalorder %s16, 11
      %p116 = por %p114, %p115
      %p117 = scmp.ne.s32.totalorder %s108, %s109
      %p118 = scmp.eq.s32.totalorder %s16, 0
      %p119 = por %p117, %p118
      %p120 = scmp.ne.s32.totalorder %s108, %s109
      %p121 = scmp.eq.s32.totalorder %s17, 11
      %p122 = por %p120, %p121
      %p124 = scmp.ne.s32.totalorder %s109, %s123
      %p125 = scmp.eq.s32.totalorder %s17, 0
      %p126 = por %p124, %p125
      %s128 = sadd.s32 %s127, 1
      %p131 = scmp.eq.s32.totalorder %s11, 11
      %p132 = scmp.ne.s32.totalorder %s127, %s129
      %p133 = scmp.eq.s32.totalorder %s11, 0
      %p134 = por %p132, %p133
      %p135 = scmp.ne.s32.totalorder %s127, %s129
      %p136 = scmp.eq.s32.totalorder %s16, 11
      %p137 = por %p135, %p136
      %p138 = scmp.ne.s32.totalorder %s129, %s130
      %p139 = scmp.eq.s32.totalorder %s16, 0
      %p140 = por %p138, %p139
      %p141 = scmp.ne.s32.totalorder %s129, %s130
      %p142 = scmp.eq.s32.totalorder %s17, 11
      %p143 = por %p141, %p142
      %p145 = scmp.ne.s32.totalorder %s130, %s144
      %p146 = scmp.eq.s32.totalorder %s17, 0
      %p147 = por %p145, %p146
      %s148 = ssub.s32 %s18, %s30
      %p149 = scmp.eq.s32.totalorder %s148, 0
      %s151 = sadd.s32 %s150, 1
      %s152 = scalar_select %p149, %s150, %s151
      %p155 = pneg %p149
      %p156 = scmp.eq.s32.totalorder %s11, 11
      %p157 = por %p155, %p156
      %p158 = scmp.ne.s32.totalorder %s150, %s153
      %p159 = scmp.eq.s32.totalorder %s11, 0
      %p160 = por %p158, %p159
      %p161 = scmp.ne.s32.totalorder %s150, %s153
      %p162 = scmp.eq.s32.totalorder %s16, 11
      %p163 = por %p161, %p162
      %p164 = scmp.ne.s32.totalorder %s153, %s154
      %p165 = scmp.eq.s32.totalorder %s16, 0
      %p166 = por %p164, %p165
      %p167 = scmp.ne.s32.totalorder %s153, %s154
      %p168 = scmp.eq.s32.totalorder %s17, 11
      %p169 = por %p167, %p168
      %p171 = scmp.ne.s32.totalorder %s154, %s170
      %p172 = scmp.eq.s32.totalorder %s17, 0
      %p173 = por %p171, %p172
      %p174 = scmp.le.s32.totalorder 1, %s11
      %p175 = scmp.lt.s32.totalorder %s11, 13
      %p176 = pnand %p174, %p175
      %p177 = pneg %p176
      // Predicated region
      $region9: #{encoder_forward.1} parent=5 // pred_check
        _
      $region10: #{encoder_forward.1} parent=5 // pred_check_branch
        %179 = sbr.rel (%p176) target = $region12
      $region11: #{encoder_forward.1} parent=5 // pred_region
        %s180 = ssub.s32 %s11, 1
        // Predicated region
        $region13: #{encoder_forward.1} parent=11 // pred_check
          %p181 = pneg %p98
        $region14: #{encoder_forward.1} parent=11 // pred_check_branch
          %183 = sbr.rel (%p181) target = $region16
        $region15: #{encoder_forward.1} parent=11 // pred_region
          _
        $region16: #{encoder_forward.1} parent=11 // pred_fallthru
          _
        // Predicated region
        $region17: #{encoder_forward.1} parent=11 // pred_check
          %p184 = pneg %p119
        $region18: #{encoder_forward.1} parent=11 // pred_check_branch
          %186 = sbr.rel (%p184) target = $region20
        $region19: #{encoder_forward.1} parent=11 // pred_region
          _
        $region20: #{encoder_forward.1} parent=11 // pred_fallthru
          _
        // Predicated region
        $region21: #{encoder_forward.1} parent=11 // pred_check
          %p187 = pneg %p140
        $region22: #{encoder_forward.1} parent=11 // pred_check_branch
          %189 = sbr.rel (%p187) target = $region24
        $region23: #{encoder_forward.1} parent=11 // pred_region
          _
        $region24: #{encoder_forward.1} parent=11 // pred_fallthru
          _
      $region12: #{encoder_forward.1} parent=5 // pred_fallthru
        _
      %p190 = scmp.lt.s32.totalorder %s11, 12
      // Predicated region
      $region25: #{encoder_forward.1} parent=5 // pred_check
        %p191 = pneg %p190
      $region26: #{encoder_forward.1} parent=5 // pred_check_branch
        %193 = sbr.rel (%p191) target = $region28
      $region27: #{encoder_forward.1} parent=5 // pred_region
        // Predicated region
        $region29: #{encoder_forward.1} parent=27 // pred_check
          %p194 = pneg %p45
        $region30: #{encoder_forward.1} parent=27 // pred_check_branch
          %196 = sbr.rel (%p194) target = $region32
        $region31: #{encoder_forward.1} parent=27 // pred_region
          %s197 = sand.u32 %s35, 1
          %s198 = sand.u32 %s35, 1
          %s199 = smul.addr %s198, 64
          %s200 = scalar_lea.vmem [#allocation3], %s199
          %s201 = smul.u32 8, %s18
          %s202 = smul.u32 2, %s19
          %s203 = smul.addr %s201, 8
          %s204 = sadd.s32 %s202, %s203
          %s205 = smul.addr %s204, 4
          %s206 = scalar_lea.vmem %s0, %s205
          // Predicated region
          $region33: #{encoder_forward.1} parent=31 // pred_check
            _
          $region34: #{encoder_forward.1} parent=31 // pred_check_branch
            %208 = sbr.rel (0) target = $region36
          $region35: #{encoder_forward.1} parent=31 // pred_region
            // Predicated region
            $region37: #{encoder_forward.1} parent=35 // pred_check
              _
            $region38: #{encoder_forward.1} parent=35 // pred_check_branch
              %210 = sbr.rel (0) target = $region40
            $region39: #{encoder_forward.1} parent=35 // pred_region
              // Predicated region
              $region52: #{encoder_forward.1} parent=39 // pred_check
                _
              $region53: #{encoder_forward.1} parent=39 // pred_check_branch
                %239 = sbr.rel (0) target = $region55
              $region54: #{encoder_forward.1} parent=39 // pred_region
                loop: start=0, step=1, limit=1
                $region56: #{encoder_forward.1} parent=54 // loop_pre_header
                  _
                $region57: #{encoder_forward.1} parent=54 // loop_header
                  %s241 = sphi 0, %s245
                  %p242 = scmp.ge.s32.totalorder %s241, 1
                  %s246 = sphi %s206, %s206
                  %s247 = sphi %s200, %s200
                $region58: #{encoder_forward.1} parent=54 // loop_header_branch
                  %244 = sbr.rel (%p242) target = $region62
                $region59: #{encoder_forward.1} parent=54 // loop_body
                  %v248 = vld [vmem:[%s246] sm:$0xff]
                  %249 = vst [vmem:[%s247] sm:$0xff] %v248
                  %v250 = vld [vmem:[%s246 + $0x20] sm:$0xff]
                  %251 = vst [vmem:[%s247 + $0x8] sm:$0xff] %v250
                  %v252 = vld [vmem:[%s246 + $0x40] sm:$0xff]
                  %253 = vst [vmem:[%s247 + $0x10] sm:$0xff] %v252
                  %v254 = vld [vmem:[%s246 + $0x60] sm:$0xff]
                  %255 = vst [vmem:[%s247 + $0x18] sm:$0xff] %v254
                  %v256 = vld [vmem:[%s246 + $0x80] sm:$0xff]
                  %257 = vst [vmem:[%s247 + $0x20] sm:$0xff] %v256
                  %v258 = vld [vmem:[%s246 + $0xa0] sm:$0xff]
                  %259 = vst [vmem:[%s247 + $0x28] sm:$0xff] %v258
                  %v260 = vld [vmem:[%s246 + $0xc0] sm:$0xff]
                  %261 = vst [vmem:[%s247 + $0x30] sm:$0xff] %v260
                  %v262 = vld [vmem:[%s246 + $0xe0] sm:$0xff]
                  %263 = vst [vmem:[%s247 + $0x38] sm:$0xff] %v262
                $region60: #{encoder_forward.1} parent=54 // loop_footer
                  %s245 = sadd.s32 1, %s241
                $region61: #{encoder_forward.1} parent=54 // loop_footer_branch
                  %240 = sbr.rel target = $region57
                $region62: #{encoder_forward.1} parent=54 // loop_exit
                  _
              $region55: #{encoder_forward.1} parent=39 // pred_fallthru
                _
              // Predicated region
              $region63: #{encoder_forward.1} parent=39 // pred_check
                _
              $region64: #{encoder_forward.1} parent=39 // pred_check_branch
                %265 = sbr.rel target = $region66
              $region65: #{encoder_forward.1} parent=39 // pred_region
                _
              $region66: #{encoder_forward.1} parent=39 // pred_fallthru
                _
            $region40: #{encoder_forward.1} parent=35 // pred_fallthru
              _
            // Predicated region
            $region41: #{encoder_forward.1} parent=35 // pred_check
              _
            $region42: #{encoder_forward.1} parent=35 // pred_check_branch
              %212 = sbr.rel target = $region44
            $region43: #{encoder_forward.1} parent=35 // pred_region
              loop: start=0, step=1, limit=1
              $region45: #{encoder_forward.1} parent=43 // loop_pre_header
                _
              $region46: #{encoder_forward.1} parent=43 // loop_header
                %s215 = sphi 0, %s219
                %p216 = scmp.ge.s32.totalorder %s215, 1
                %s220 = sphi %s206, %s206
                %s221 = sphi %s200, %s200
              $region47: #{encoder_forward.1} parent=43 // loop_header_branch
                %218 = sbr.rel (%p216) target = $region51
              $region48: #{encoder_forward.1} parent=43 // loop_body
                %v222 = vld [vmem:[%s220] sm:$0xff]
                %223 = vst [vmem:[%s221] sm:$0xff] %v222
                %v224 = vld [vmem:[%s220 + $0x20] sm:$0xff]
                %225 = vst [vmem:[%s221 + $0x8] sm:$0xff] %v224
                %v226 = vld [vmem:[%s220 + $0x40] sm:$0xff]
                %227 = vst [vmem:[%s221 + $0x10] sm:$0xff] %v226
                %v228 = vld [vmem:[%s220 + $0x60] sm:$0xff]
                %229 = vst [vmem:[%s221 + $0x18] sm:$0xff] %v228
                %v230 = vld [vmem:[%s220 + $0x80] sm:$0xff]
                %231 = vst [vmem:[%s221 + $0x20] sm:$0xff] %v230
                %v232 = vld [vmem:[%s220 + $0xa0] sm:$0xff]
                %233 = vst [vmem:[%s221 + $0x28] sm:$0xff] %v232
                %v234 = vld [vmem:[%s220 + $0xc0] sm:$0xff]
                %235 = vst [vmem:[%s221 + $0x30] sm:$0xff] %v234
                %v236 = vld [vmem:[%s220 + $0xe0] sm:$0xff]
                %237 = vst [vmem:[%s221 + $0x38] sm:$0xff] %v236
              $region49: #{encoder_forward.1} parent=43 // loop_footer
                %s219 = sadd.s32 1, %s215
              $region50: #{encoder_forward.1} parent=43 // loop_footer_branch
                %214 = sbr.rel target = $region46
              $region51: #{encoder_forward.1} parent=43 // loop_exit
                _
            $region44: #{encoder_forward.1} parent=35 // pred_fallthru
              _
          $region36: #{encoder_forward.1} parent=31 // pred_fallthru
            _
          %266 = vnop
        $region32: #{encoder_forward.1} parent=27 // pred_fallthru
          _
        // Predicated region
        $region67: #{encoder_forward.1} parent=27 // pred_check
          %p267 = pneg %p71
        $region68: #{encoder_forward.1} parent=27 // pred_check_branch
          %269 = sbr.rel (%p267) target = $region70
        $region69: #{encoder_forward.1} parent=27 // pred_region
          %s270 = smul.u32 32, %s19
          %p271 = scmp.lt.s32.totalorder %s270, 127
          %s272 = scalar_select %p271, %s270, 127
          %s273 = smul.addr %s272, 2
          %s274 = smul.addr %s273, 4
          %s275 = scalar_lea.vmem %s1, %s274
          %s276 = smul.u32 32, %s19
        $region70: #{encoder_forward.1} parent=27 // pred_fallthru
          _
      $region28: #{encoder_forward.1} parent=5 // pred_fallthru
        _
      %p277 = scmp.le.s32.totalorder 1, %s11
      %p278 = scmp.lt.s32.totalorder %s11, 13
      %p279 = pnand %p277, %p278
      %p280 = pneg %p279
      // Predicated region
      $region71: #{encoder_forward.1} parent=5 // pred_check
        _
      $region72: #{encoder_forward.1} parent=5 // pred_check_branch
        %282 = sbr.rel (%p279) target = $region74
      $region73: #{encoder_forward.1} parent=5 // pred_region
        %s283 = ssub.s32 %s11, 1
        %s284 = sand.u32 %s38, 1
        %s285 = sand.u32 %s38, 1
        %s286 = smul.addr %s285, 64
        %s287 = scalar_lea.vmem [#allocation3], %s286
        // Predicated region
        $region75: #{encoder_forward.1} parent=73 // pred_check
          %p288 = pneg %p51
        $region76: #{encoder_forward.1} parent=73 // pred_check_branch
          %290 = sbr.rel (%p288) target = $region78
        $region77: #{encoder_forward.1} parent=73 // pred_region
          _
        $region78: #{encoder_forward.1} parent=73 // pred_fallthru
          _
        %s291 = sand.u32 %s38, 1
        %s292 = sand.u32 %s38, 1
        %s293 = smul.addr %s292, 64
        %s294 = scalar_lea.vmem [#allocation3], %s293
        %p295 = pneg %p51
        %p296 = pneg %p48
        %s297 = smul.u32 32, %s21
        %p298 = scmp.lt.s32.totalorder %s297, 127
        %s299 = scalar_select %p298, %s297, 127
        %s300 = smul.addr %s299, 2
        %s301 = smul.addr %s300, 4
        %s302 = scalar_lea.vmem %s1, %s301
        %p303 = pneg %p77
        %p304 = pneg %p74
        %p305 = pneg %p98
        %p306 = pneg %p95
        %p307 = pneg %p119
        %p308 = pneg %p116
        %p309 = pneg %p140
        %p310 = pneg %p137
        %p311 = pneg %p166
        %p312 = pneg %p163
        %s313 = smul.u32 8, %s20
        %p314 = scmp.lt.s32.totalorder %s313, 23
        %s315 = scalar_select %p314, %s313, 23
        %s316 = smul.addr %s315, 2
        %s317 = smul.addr %s316, 8
        %s318 = scalar_lea.vmem %s5, %s317
        %s319 = smul.u32 8, %s20
        %s320 = smul.u32 2, %s21
        %s321 = smul.u32 32, %s21
        %p322 = scmp.lt.s32.totalorder %s321, 127
        %s323 = scalar_select %p322, %s321, 127
        %s324 = smul.addr %s323, 2
        %s325 = smul.addr %s324, 4
        %s326 = scalar_lea.vmem %s1, %s325
        %s327 = smul.u32 32, %s21
        %s328 = smul.u32 8, %s20
        %p329 = scmp.lt.s32.totalorder %s328, 23
        %s330 = scalar_select %p329, %s328, 23
        %s331 = smul.addr %s330, 2
        %s332 = smul.addr %s331, 8
        %s333 = scalar_lea.vmem %s5, %s332
        %s334 = smul.u32 8, %s20
        %p335 = scmp.eq.s32.totalorder %s21, 0
        // Predicated region
        $region79: #{encoder_forward.1} parent=73 // pred_check
          %p336 = pneg %p335
        $region80: #{encoder_forward.1} parent=73 // pred_check_branch
          %338 = sbr.rel (%p336) target = $region82
        $region81: #{encoder_forward.1} parent=73 // pred_region
          %339 = vst [vmem:[#allocation2] sm:$0xff] 0.0
          %340 = vst [vmem:[#allocation2 + $0x8] sm:$0xff] 0.0
          %341 = vst [vmem:[#allocation2 + $0x10] sm:$0xff] 0.0
          %342 = vst [vmem:[#allocation2 + $0x18] sm:$0xff] 0.0
          %343 = vst [vmem:[#allocation2 + $0x20] sm:$0xff] 0.0
          %344 = vst [vmem:[#allocation2 + $0x28] sm:$0xff] 0.0
          %345 = vst [vmem:[#allocation2 + $0x30] sm:$0xff] 0.0
          %346 = vst [vmem:[#allocation2 + $0x38] sm:$0xff] 0.0
          %347 = vst [vmem:[#allocation2 + $0x40] sm:$0xff] 0.0
          %348 = vst [vmem:[#allocation2 + $0x48] sm:$0xff] 0.0
          %349 = vst [vmem:[#allocation2 + $0x50] sm:$0xff] 0.0
          %350 = vst [vmem:[#allocation2 + $0x58] sm:$0xff] 0.0
          %351 = vst [vmem:[#allocation2 + $0x60] sm:$0xff] 0.0
          %352 = vst [vmem:[#allocation2 + $0x68] sm:$0xff] 0.0
          %353 = vst [vmem:[#allocation2 + $0x70] sm:$0xff] 0.0
          %354 = vst [vmem:[#allocation2 + $0x78] sm:$0xff] 0.0
        $region82: #{encoder_forward.1} parent=73 // pred_fallthru
          _
        %v355 = vld [vmem:[#allocation2] sm:$0xff]
        %v356 = vld [vmem:[#allocation2 + $0x8] sm:$0xff]
        %v357 = vld [vmem:[#allocation2 + $0x10] sm:$0xff]
        %v358 = vld [vmem:[#allocation2 + $0x18] sm:$0xff]
        %v359 = vld [vmem:[#allocation2 + $0x20] sm:$0xff]
        %v360 = vld [vmem:[#allocation2 + $0x28] sm:$0xff]
        %v361 = vld [vmem:[#allocation2 + $0x30] sm:$0xff]
        %v362 = vld [vmem:[#allocation2 + $0x38] sm:$0xff]
        %v363 = vld [vmem:[#allocation2 + $0x40] sm:$0xff]
        %v364 = vld [vmem:[#allocation2 + $0x48] sm:$0xff]
        %v365 = vld [vmem:[#allocation2 + $0x50] sm:$0xff]
        %v366 = vld [vmem:[#allocation2 + $0x58] sm:$0xff]
        %v367 = vld [vmem:[#allocation2 + $0x60] sm:$0xff]
        %v368 = vld [vmem:[#allocation2 + $0x68] sm:$0xff]
        %v369 = vld [vmem:[#allocation2 + $0x70] sm:$0xff]
        %v370 = vld [vmem:[#allocation2 + $0x78] sm:$0xff]
        %v371 = vld [vmem:[%s287] sm:$0xff]
        %v372 = vld [vmem:[%s287 + $0x8] sm:$0xff]
        %v373 = vld [vmem:[%s287 + $0x10] sm:$0xff]
        %v374 = vld [vmem:[%s287 + $0x18] sm:$0xff]
        %v375 = vld [vmem:[%s287 + $0x20] sm:$0xff]
        %v376 = vld [vmem:[%s287 + $0x28] sm:$0xff]
        %v377 = vld [vmem:[%s287 + $0x30] sm:$0xff]
        %v378 = vld [vmem:[%s287 + $0x38] sm:$0xff]
        %v379 = vld [vmem:[%s326] sm:$0xff]
        %v380 = vld [vmem:[%s326 + $0x8] sm:$0xff]
        %v381 = vld [vmem:[%s326 + $0x10] sm:$0xff]
        %v382 = vld [vmem:[%s326 + $0x18] sm:$0xff]
        %v383 = vld [vmem:[%s326 + $0x20] sm:$0xff]
        %v384 = vld [vmem:[%s326 + $0x28] sm:$0xff]
        %v385 = vld [vmem:[%s326 + $0x30] sm:$0xff]
        %v386 = vld [vmem:[%s326 + $0x38] sm:$0xff]
        %v387 = vld [vmem:[%s326 + $0x40] sm:$0xff]
        %v388 = vld [vmem:[%s326 + $0x48] sm:$0xff]
        %v389 = vld [vmem:[%s326 + $0x50] sm:$0xff]
        %v390 = vld [vmem:[%s326 + $0x58] sm:$0xff]
        %v391 = vld [vmem:[%s326 + $0x60] sm:$0xff]
        %v392 = vld [vmem:[%s326 + $0x68] sm:$0xff]
        %v393 = vld [vmem:[%s326 + $0x70] sm:$0xff]
        %v394 = vld [vmem:[%s326 + $0x78] sm:$0xff]
        %v395 = vld [vmem:[%s326 + $0x80] sm:$0xff]
        %v396 = vld [vmem:[%s326 + $0x88] sm:$0xff]
        %v397 = vld [vmem:[%s326 + $0x90] sm:$0xff]
        %v398 = vld [vmem:[%s326 + $0x98] sm:$0xff]
        %v399 = vld [vmem:[%s326 + $0xa0] sm:$0xff]
        %v400 = vld [vmem:[%s326 + $0xa8] sm:$0xff]
        %v401 = vld [vmem:[%s326 + $0xb0] sm:$0xff]
        %v402 = vld [vmem:[%s326 + $0xb8] sm:$0xff]
        %v403 = vld [vmem:[%s326 + $0xc0] sm:$0xff]
        %v404 = vld [vmem:[%s326 + $0xc8] sm:$0xff]
        %v405 = vld [vmem:[%s326 + $0xd0] sm:$0xff]
        %v406 = vld [vmem:[%s326 + $0xd8] sm:$0xff]
        %v407 = vld [vmem:[%s326 + $0xe0] sm:$0xff]
        %v408 = vld [vmem:[%s326 + $0xe8] sm:$0xff]
        %v409 = vld [vmem:[%s326 + $0xf0] sm:$0xff]
        %v410 = vld [vmem:[%s326 + $0xf8] sm:$0xff]
        %v419 = vunpack.c.l.b16 %v371
        %v420 = vunpack.c.h.b16 %v371
        %v421 = vunpack.c.l.b16 %v372
        %v422 = vunpack.c.h.b16 %v372
        %v423 = vunpack.c.l.b16 %v373
        %v424 = vunpack.c.h.b16 %v373
        %v425 = vunpack.c.l.b16 %v374
        %v426 = vunpack.c.h.b16 %v374
        %v427 = vunpack.c.l.b16 %v375
        %v428 = vunpack.c.h.b16 %v375
        %v429 = vunpack.c.l.b16 %v376
        %v430 = vunpack.c.h.b16 %v376
        %v431 = vunpack.c.l.b16 %v377
        %v432 = vunpack.c.h.b16 %v377
        %v433 = vunpack.c.l.b16 %v378
        %v434 = vunpack.c.h.b16 %v378
        %v435 = vpack.c.b16 %v421, %v419
        %v436 = vpack.c.b16 %v422, %v420
        %v437 = vpack.c.b16 %v425, %v423
        %v438 = vpack.c.b16 %v426, %v424
        %v439 = vpack.c.b16 %v429, %v427
        %v440 = vpack.c.b16 %v430, %v428
        %v441 = vpack.c.b16 %v433, %v431
        %v442 = vpack.c.b16 %v434, %v432
        %v483 = vunpack.c.l.b16 %v379
        %v484 = vunpack.c.h.b16 %v379
        %v485 = vunpack.c.l.b16 %v380
        %v486 = vunpack.c.h.b16 %v380
        %v487 = vunpack.c.l.b16 %v381
        %v488 = vunpack.c.h.b16 %v381
        %v489 = vunpack.c.l.b16 %v382
        %v490 = vunpack.c.h.b16 %v382
        %v491 = vunpack.c.l.b16 %v383
        %v492 = vunpack.c.h.b16 %v383
        %v493 = vunpack.c.l.b16 %v384
        %v494 = vunpack.c.h.b16 %v384
        %v495 = vunpack.c.l.b16 %v385
        %v496 = vunpack.c.h.b16 %v385
        %v497 = vunpack.c.l.b16 %v386
        %v498 = vunpack.c.h.b16 %v386
        %v499 = vunpack.c.l.b16 %v387
        %v500 = vunpack.c.h.b16 %v387
        %v501 = vunpack.c.l.b16 %v388
        %v502 = vunpack.c.h.b16 %v388
        %v503 = vunpack.c.l.b16 %v389
        %v504 = vunpack.c.h.b16 %v389
        %v505 = vunpack.c.l.b16 %v390
        %v506 = vunpack.c.h.b16 %v390
        %v507 = vunpack.c.l.b16 %v391
        %v508 = vunpack.c.h.b16 %v391
        %v509 = vunpack.c.l.b16 %v392
        %v510 = vunpack.c.h.b16 %v392
        %v511 = vunpack.c.l.b16 %v393
        %v512 = vunpack.c.h.b16 %v393
        %v513 = vunpack.c.l.b16 %v394
        %v514 = vunpack.c.h.b16 %v394
        %v515 = vunpack.c.l.b16 %v395
        %v516 = vunpack.c.h.b16 %v395
        %v517 = vunpack.c.l.b16 %v396
        %v518 = vunpack.c.h.b16 %v396
        %v519 = vunpack.c.l.b16 %v397
        %v520 = vunpack.c.h.b16 %v397
        %v521 = vunpack.c.l.b16 %v398
        %v522 = vunpack.c.h.b16 %v398
        %v523 = vunpack.c.l.b16 %v399
        %v524 = vunpack.c.h.b16 %v399
        %v525 = vunpack.c.l.b16 %v400
        %v526 = vunpack.c.h.b16 %v400
        %v527 = vunpack.c.l.b16 %v401
        %v528 = vunpack.c.h.b16 %v401
        %v529 = vunpack.c.l.b16 %v402
        %v530 = vunpack.c.h.b16 %v402
        %v531 = vunpack.c.l.b16 %v403
        %v532 = vunpack.c.h.b16 %v403
        %v533 = vunpack.c.l.b16 %v404
        %v534 = vunpack.c.h.b16 %v404
        %v535 = vunpack.c.l.b16 %v405
        %v536 = vunpack.c.h.b16 %v405
        %v537 = vunpack.c.l.b16 %v406
        %v538 = vunpack.c.h.b16 %v406
        %v539 = vunpack.c.l.b16 %v407
        %v540 = vunpack.c.h.b16 %v407
        %v541 = vunpack.c.l.b16 %v408
        %v542 = vunpack.c.h.b16 %v408
        %v543 = vunpack.c.l.b16 %v409
        %v544 = vunpack.c.h.b16 %v409
        %v545 = vunpack.c.l.b16 %v410
        %v546 = vunpack.c.h.b16 %v410
        %v547 = vpack.c.b16 %v485, %v483
        %v548 = vpack.c.b16 %v486, %v484
        %v549 = vpack.c.b16 %v489, %v487
        %v550 = vpack.c.b16 %v490, %v488
        %v551 = vpack.c.b16 %v493, %v491
        %v552 = vpack.c.b16 %v494, %v492
        %v553 = vpack.c.b16 %v497, %v495
        %v554 = vpack.c.b16 %v498, %v496
        %v555 = vpack.c.b16 %v501, %v499
        %v556 = vpack.c.b16 %v502, %v500
        %v557 = vpack.c.b16 %v505, %v503
        %v558 = vpack.c.b16 %v506, %v504
        %v559 = vpack.c.b16 %v509, %v507
        %v560 = vpack.c.b16 %v510, %v508
        %v561 = vpack.c.b16 %v513, %v511
        %v562 = vpack.c.b16 %v514, %v512
        %v563 = vpack.c.b16 %v517, %v515
        %v564 = vpack.c.b16 %v518, %v516
        %v565 = vpack.c.b16 %v521, %v519
        %v566 = vpack.c.b16 %v522, %v520
        %v567 = vpack.c.b16 %v525, %v523
        %v568 = vpack.c.b16 %v526, %v524
        %v569 = vpack.c.b16 %v529, %v527
        %v570 = vpack.c.b16 %v530, %v528
        %v571 = vpack.c.b16 %v533, %v531
        %v572 = vpack.c.b16 %v534, %v532
        %v573 = vpack.c.b16 %v537, %v535
        %v574 = vpack.c.b16 %v538, %v536
        %v575 = vpack.c.b16 %v541, %v539
        %v576 = vpack.c.b16 %v542, %v540
        %v577 = vpack.c.b16 %v545, %v543
        %v578 = vpack.c.b16 %v546, %v544
        %611 = vmatprep.subr.bf16.mxu0 %v548
        %612 = vmatpush1.bf16.msra.mxu0 %v547
        %613 = vmatprep.subr.bf16.mxu0 %v550
        %614 = vmatpush1.bf16.msra.mxu0 %v549
        %615 = vmatprep.subr.bf16.mxu0 %v552
        %616 = vmatpush1.bf16.msra.mxu0 %v551
        %617 = vmatprep.subr.bf16.mxu0 %v554
        %618 = vmatpush1.bf16.msra.mxu0 %v553
        %619 = vmatprep.subr.bf16.mxu0 %v556
        %620 = vmatpush1.bf16.msra.mxu0 %v555
        %621 = vmatprep.subr.bf16.mxu0 %v558
        %622 = vmatpush1.bf16.msra.mxu0 %v557
        %623 = vmatprep.subr.bf16.mxu0 %v560
        %624 = vmatpush1.bf16.msra.mxu0 %v559
        %625 = vmatprep.subr.bf16.mxu0 %v562
        %626 = vmatpush1.bf16.msra.mxu0 %v561
        %627 = vmatprep.subr.bf16.mxu0 %v564
        %628 = vmatpush1.bf16.msra.mxu0 %v563
        %629 = vmatprep.subr.bf16.mxu0 %v566
        %630 = vmatpush1.bf16.msra.mxu0 %v565
        %631 = vmatprep.subr.bf16.mxu0 %v568
        %632 = vmatpush1.bf16.msra.mxu0 %v567
        %633 = vmatprep.subr.bf16.mxu0 %v570
        %634 = vmatpush1.bf16.msra.mxu0 %v569
        %635 = vmatprep.subr.bf16.mxu0 %v572
        %636 = vmatpush1.bf16.msra.mxu0 %v571
        %637 = vmatprep.subr.bf16.mxu0 %v574
        %638 = vmatpush1.bf16.msra.mxu0 %v573
        %639 = vmatprep.subr.bf16.mxu0 %v576
        %640 = vmatpush1.bf16.msra.mxu0 %v575
        %641 = vmatprep.subr.bf16.mxu0 %v578
        %642 = vmatpush1.bf16.msra.mxu0 %v577
        %643 = vmatprep.mubr.bf16.mxu0 %v436
        %644 = vmatmul.mubr.bf16.gmra.mrb[0].mxu0 %v435
        %v645 = vpop.f32.mrb[0].mxu0
        %v646 = vadd.f32 0.0, %v645
        %v647 = vpop.f32.mrb[0].mxu0
        %v648 = vadd.f32 0.0, %v647
        %v649 = vpop.f32.mrb[0].mxu0
        %v650 = vadd.f32 0.0, %v649
        %v651 = vpop.f32.mrb[0].mxu0
        %v652 = vadd.f32 0.0, %v651
        %653 = vmatprep.mubr.bf16.mxu0 %v438
        %654 = vmatmul.mubr.bf16.gmra.mrb[0].mxu0 %v437
        %v655 = vpop.f32.mrb[0].mxu0
        %v656 = vadd.f32 0.0, %v655
        %v657 = vpop.f32.mrb[0].mxu0
        %v658 = vadd.f32 0.0, %v657
        %v659 = vpop.f32.mrb[0].mxu0
        %v660 = vadd.f32 0.0, %v659
        %v661 = vpop.f32.mrb[0].mxu0
        %v662 = vadd.f32 0.0, %v661
        %663 = vmatprep.mubr.bf16.mxu0 %v440
        %664 = vmatmul.mubr.bf16.gmra.mrb[0].mxu0 %v439
        %v665 = vpop.f32.mrb[0].mxu0
        %v666 = vadd.f32 0.0, %v665
        %v667 = vpop.f32.mrb[0].mxu0
        %v668 = vadd.f32 0.0, %v667
        %v669 = vpop.f32.mrb[0].mxu0
        %v670 = vadd.f32 0.0, %v669
        %v671 = vpop.f32.mrb[0].mxu0
        %v672 = vadd.f32 0.0, %v671
        %673 = vmatprep.mubr.bf16.mxu0 %v442
        %674 = vmatmul.mubr.bf16.gmra.mrb[0].mxu0 %v441
        %v675 = vpop.f32.mrb[0].mxu0
        %v676 = vadd.f32 0.0, %v675
        %v677 = vpop.f32.mrb[0].mxu0
        %v678 = vadd.f32 0.0, %v677
        %v679 = vpop.f32.mrb[0].mxu0
        %v680 = vadd.f32 0.0, %v679
        %v681 = vpop.f32.mrb[0].mxu0
        %v682 = vadd.f32 0.0, %v681
        %683 = vdwg.mxu0
        %v684 = vadd.f32 %v355, %v646
        %v685 = vadd.f32 %v356, %v648
        %v686 = vadd.f32 %v357, %v650
        %v687 = vadd.f32 %v358, %v652
        %v688 = vadd.f32 %v359, %v656
        %v689 = vadd.f32 %v360, %v658
        %v690 = vadd.f32 %v361, %v660
        %v691 = vadd.f32 %v362, %v662
        %v692 = vadd.f32 %v363, %v666
        %v693 = vadd.f32 %v364, %v668
        %v694 = vadd.f32 %v365, %v670
        %v695 = vadd.f32 %v366, %v672
        %v696 = vadd.f32 %v367, %v676
        %v697 = vadd.f32 %v368, %v678
        %v698 = vadd.f32 %v369, %v680
        %v699 = vadd.f32 %v370, %v682
        %700 = vst [vmem:[#allocation2] sm:$0xff] %v684
        %701 = vst [vmem:[#allocation2 + $0x8] sm:$0xff] %v685
        %702 = vst [vmem:[#allocation2 + $0x10] sm:$0xff] %v686
        %703 = vst [vmem:[#allocation2 + $0x18] sm:$0xff] %v687
        %704 = vst [vmem:[#allocation2 + $0x20] sm:$0xff] %v688
        %705 = vst [vmem:[#allocation2 + $0x28] sm:$0xff] %v689
        %706 = vst [vmem:[#allocation2 + $0x30] sm:$0xff] %v690
        %707 = vst [vmem:[#allocation2 + $0x38] sm:$0xff] %v691
        %708 = vst [vmem:[#allocation2 + $0x40] sm:$0xff] %v692
        %709 = vst [vmem:[#allocation2 + $0x48] sm:$0xff] %v693
        %710 = vst [vmem:[#allocation2 + $0x50] sm:$0xff] %v694
        %711 = vst [vmem:[#allocation2 + $0x58] sm:$0xff] %v695
        %712 = vst [vmem:[#allocation2 + $0x60] sm:$0xff] %v696
        %713 = vst [vmem:[#allocation2 + $0x68] sm:$0xff] %v697
        %714 = vst [vmem:[#allocation2 + $0x70] sm:$0xff] %v698
        %715 = vst [vmem:[#allocation2 + $0x78] sm:$0xff] %v699
        %p716 = scmp.eq.s32.totalorder %s21, 3
        // Predicated region
        $region83: #{encoder_forward.1} parent=73 // pred_check
          %p717 = pneg %p716
        $region84: #{encoder_forward.1} parent=73 // pred_check_branch
          %719 = sbr.rel (%p717) target = $region86
        $region85: #{encoder_forward.1} parent=73 // pred_region
          %v720 = vld [vmem:[#allocation2] sm:$0xff]
          %v721 = vld [vmem:[#allocation2 + $0x8] sm:$0xff]
          %v722 = vld [vmem:[#allocation2 + $0x10] sm:$0xff]
          %v723 = vld [vmem:[#allocation2 + $0x18] sm:$0xff]
          %v724 = vld [vmem:[#allocation2 + $0x20] sm:$0xff]
          %v725 = vld [vmem:[#allocation2 + $0x28] sm:$0xff]
          %v726 = vld [vmem:[#allocation2 + $0x30] sm:$0xff]
          %v727 = vld [vmem:[#allocation2 + $0x38] sm:$0xff]
          %v728 = vld [vmem:[#allocation2 + $0x40] sm:$0xff]
          %v729 = vld [vmem:[#allocation2 + $0x48] sm:$0xff]
          %v730 = vld [vmem:[#allocation2 + $0x50] sm:$0xff]
          %v731 = vld [vmem:[#allocation2 + $0x58] sm:$0xff]
          %v732 = vld [vmem:[#allocation2 + $0x60] sm:$0xff]
          %v733 = vld [vmem:[#allocation2 + $0x68] sm:$0xff]
          %v734 = vld [vmem:[#allocation2 + $0x70] sm:$0xff]
          %v735 = vld [vmem:[#allocation2 + $0x78] sm:$0xff]
          %v736 = vld [vmem:[%s2] sm:$0x3]
          %v738 = vlaneseq
          %v739 = vshrl.u32 %v738, 7
          %v740 = vsub.s32 0, %v739
          %v741 = vrot.slane %v736, %v740
          %v742 = vlaneseq
          %v743 = vshrl.u32 %v742, 7
          %v744 = vsub.s32 1, %v743
          %v745 = vrot.slane %v736, %v744
          %v748 = vadd.f32 %v720, %v741
          %v749 = vadd.f32 %v721, %v745
          %v750 = vadd.f32 %v722, %v741
          %v751 = vadd.f32 %v723, %v745
          %v752 = vadd.f32 %v724, %v741
          %v753 = vadd.f32 %v725, %v745
          %v754 = vadd.f32 %v726, %v741
          %v755 = vadd.f32 %v727, %v745
          %v756 = vadd.f32 %v728, %v741
          %v757 = vadd.f32 %v729, %v745
          %v758 = vadd.f32 %v730, %v741
          %v759 = vadd.f32 %v731, %v745
          %v760 = vadd.f32 %v732, %v741
          %v761 = vadd.f32 %v733, %v745
          %v762 = vadd.f32 %v734, %v741
          %v763 = vadd.f32 %v735, %v745
          %v764 = vtanh.pop %v748
          %v765 = vtanh.pop %v749
          %v766 = vtanh.pop %v750
          %v767 = vtanh.pop %v751
          %v768 = vtanh.pop %v752
          %v769 = vtanh.pop %v753
          %v770 = vtanh.pop %v754
          %v771 = vtanh.pop %v755
          %v772 = vtanh.pop %v756
          %v773 = vtanh.pop %v757
          %v774 = vtanh.pop %v758
          %v775 = vtanh.pop %v759
          %v776 = vtanh.pop %v760
          %v777 = vtanh.pop %v761
          %v778 = vtanh.pop %v762
          %v779 = vtanh.pop %v763
          %v780 = vpack.c.bf16 %v766, %v764
          %v781 = vpack.c.bf16 %v767, %v765
          %v782 = vpack.c.bf16 %v770, %v768
          %v783 = vpack.c.bf16 %v771, %v769
          %v784 = vpack.c.bf16 %v774, %v772
          %v785 = vpack.c.bf16 %v775, %v773
          %v786 = vpack.c.bf16 %v778, %v776
          %v787 = vpack.c.bf16 %v779, %v777
          %v788 = vld [vmem:[%s3] sm:$0xff]
          %v789 = vld [vmem:[%s3 + $0x8] sm:$0xff]
          %v790 = vld [vmem:[%s3 + $0x10] sm:$0xff]
          %v791 = vld [vmem:[%s3 + $0x18] sm:$0xff]
          %v792 = vld [vmem:[%s3 + $0x20] sm:$0xff]
          %v793 = vld [vmem:[%s3 + $0x28] sm:$0xff]
          %v794 = vld [vmem:[%s3 + $0x30] sm:$0xff]
          %v795 = vld [vmem:[%s3 + $0x38] sm:$0xff]
          %v796 = vld [vmem:[%s3 + $0x40] sm:$0xff]
          %v797 = vld [vmem:[%s3 + $0x48] sm:$0xff]
          %v798 = vld [vmem:[%s3 + $0x50] sm:$0xff]
          %v799 = vld [vmem:[%s3 + $0x58] sm:$0xff]
          %v800 = vld [vmem:[%s3 + $0x60] sm:$0xff]
          %v801 = vld [vmem:[%s3 + $0x68] sm:$0xff]
          %v802 = vld [vmem:[%s3 + $0x70] sm:$0xff]
          %v803 = vld [vmem:[%s3 + $0x78] sm:$0xff]
          %v804 = vld [vmem:[%s3 + $0x80] sm:$0xff]
          %v805 = vld [vmem:[%s3 + $0x88] sm:$0xff]
          %v806 = vld [vmem:[%s3 + $0x90] sm:$0xff]
          %v807 = vld [vmem:[%s3 + $0x98] sm:$0xff]
          %v808 = vld [vmem:[%s3 + $0xa0] sm:$0xff]
          %v809 = vld [vmem:[%s3 + $0xa8] sm:$0xff]
          %v810 = vld [vmem:[%s3 + $0xb0] sm:$0xff]
          %v811 = vld [vmem:[%s3 + $0xb8] sm:$0xff]
          %v812 = vld [vmem:[%s3 + $0xc0] sm:$0xff]
          %v813 = vld [vmem:[%s3 + $0xc8] sm:$0xff]
          %v814 = vld [vmem:[%s3 + $0xd0] sm:$0xff]
          %v815 = vld [vmem:[%s3 + $0xd8] sm:$0xff]
          %v816 = vld [vmem:[%s3 + $0xe0] sm:$0xff]
          %v817 = vld [vmem:[%s3 + $0xe8] sm:$0xff]
          %v818 = vld [vmem:[%s3 + $0xf0] sm:$0xff]
          %v819 = vld [vmem:[%s3 + $0xf8] sm:$0xff]
          %v820 = vld [vmem:[%s4] sm:$0x3]
          %v822 = vlaneseq
          %v823 = vshrl.u32 %v822, 7
          %v824 = vsub.s32 0, %v823
          %v825 = vrot.slane %v820, %v824
          %v826 = vlaneseq
          %v827 = vshrl.u32 %v826, 7
          %v828 = vsub.s32 1, %v827
          %v829 = vrot.slane %v820, %v828
          %v864 = vunpack.c.l.b16 %v788
          %v865 = vunpack.c.h.b16 %v788
          %v866 = vunpack.c.l.b16 %v789
          %v867 = vunpack.c.h.b16 %v789
          %v868 = vunpack.c.l.b16 %v790
          %v869 = vunpack.c.h.b16 %v790
          %v870 = vunpack.c.l.b16 %v791
          %v871 = vunpack.c.h.b16 %v791
          %v872 = vunpack.c.l.b16 %v792
          %v873 = vunpack.c.h.b16 %v792
          %v874 = vunpack.c.l.b16 %v793
          %v875 = vunpack.c.h.b16 %v793
          %v876 = vunpack.c.l.b16 %v794
          %v877 = vunpack.c.h.b16 %v794
          %v878 = vunpack.c.l.b16 %v795
          %v879 = vunpack.c.h.b16 %v795
          %v880 = vunpack.c.l.b16 %v796
          %v881 = vunpack.c.h.b16 %v796
          %v882 = vunpack.c.l.b16 %v797
          %v883 = vunpack.c.h.b16 %v797
          %v884 = vunpack.c.l.b16 %v798
          %v885 = vunpack.c.h.b16 %v798
          %v886 = vunpack.c.l.b16 %v799
          %v887 = vunpack.c.h.b16 %v799
          %v888 = vunpack.c.l.b16 %v800
          %v889 = vunpack.c.h.b16 %v800
          %v890 = vunpack.c.l.b16 %v801
          %v891 = vunpack.c.h.b16 %v801
          %v892 = vunpack.c.l.b16 %v802
          %v893 = vunpack.c.h.b16 %v802
          %v894 = vunpack.c.l.b16 %v803
          %v895 = vunpack.c.h.b16 %v803
          %v896 = vunpack.c.l.b16 %v804
          %v897 = vunpack.c.h.b16 %v804
          %v898 = vunpack.c.l.b16 %v805
          %v899 = vunpack.c.h.b16 %v805
          %v900 = vunpack.c.l.b16 %v806
          %v901 = vunpack.c.h.b16 %v806
          %v902 = vunpack.c.l.b16 %v807
          %v903 = vunpack.c.h.b16 %v807
          %v904 = vunpack.c.l.b16 %v808
          %v905 = vunpack.c.h.b16 %v808
          %v906 = vunpack.c.l.b16 %v809
          %v907 = vunpack.c.h.b16 %v809
          %v908 = vunpack.c.l.b16 %v810
          %v909 = vunpack.c.h.b16 %v810
          %v910 = vunpack.c.l.b16 %v811
          %v911 = vunpack.c.h.b16 %v811
          %v912 = vunpack.c.l.b16 %v812
          %v913 = vunpack.c.h.b16 %v812
          %v914 = vunpack.c.l.b16 %v813
          %v915 = vunpack.c.h.b16 %v813
          %v916 = vunpack.c.l.b16 %v814
          %v917 = vunpack.c.h.b16 %v814
          %v918 = vunpack.c.l.b16 %v815
          %v919 = vunpack.c.h.b16 %v815
          %v920 = vunpack.c.l.b16 %v816
          %v921 = vunpack.c.h.b16 %v816
          %v922 = vunpack.c.l.b16 %v817
          %v923 = vunpack.c.h.b16 %v817
          %v924 = vunpack.c.l.b16 %v818
          %v925 = vunpack.c.h.b16 %v818
          %v926 = vunpack.c.l.b16 %v819
          %v927 = vunpack.c.h.b16 %v819
          %v928 = vpack.c.b16 %v866, %v864
          %v929 = vpack.c.b16 %v867, %v865
          %v930 = vpack.c.b16 %v870, %v868
          %v931 = vpack.c.b16 %v871, %v869
          %v932 = vpack.c.b16 %v874, %v872
          %v933 = vpack.c.b16 %v875, %v873
          %v934 = vpack.c.b16 %v878, %v876
          %v935 = vpack.c.b16 %v879, %v877
          %v936 = vpack.c.b16 %v882, %v880
          %v937 = vpack.c.b16 %v883, %v881
          %v938 = vpack.c.b16 %v886, %v884
          %v939 = vpack.c.b16 %v887, %v885
          %v940 = vpack.c.b16 %v890, %v888
          %v941 = vpack.c.b16 %v891, %v889
          %v942 = vpack.c.b16 %v894, %v892
          %v943 = vpack.c.b16 %v895, %v893
          %v944 = vpack.c.b16 %v898, %v896
          %v945 = vpack.c.b16 %v899, %v897
          %v946 = vpack.c.b16 %v902, %v900
          %v947 = vpack.c.b16 %v903, %v901
          %v948 = vpack.c.b16 %v906, %v904
          %v949 = vpack.c.b16 %v907, %v905
          %v950 = vpack.c.b16 %v910, %v908
          %v951 = vpack.c.b16 %v911, %v909
          %v952 = vpack.c.b16 %v914, %v912
          %v953 = vpack.c.b16 %v915, %v913
          %v954 = vpack.c.b16 %v918, %v916
          %v955 = vpack.c.b16 %v919, %v917
          %v956 = vpack.c.b16 %v922, %v920
          %v957 = vpack.c.b16 %v923, %v921
          %v958 = vpack.c.b16 %v926, %v924
          %v959 = vpack.c.b16 %v927, %v925
          %992 = vmatprep.subr.bf16.mxu0 %v929
          %993 = vmatpush1.bf16.msra.mxu0 %v928
          %994 = vmatprep.subr.bf16.mxu0 %v931
          %995 = vmatpush1.bf16.msra.mxu0 %v930
          %996 = vmatprep.subr.bf16.mxu0 %v933
          %997 = vmatpush1.bf16.msra.mxu0 %v932
          %998 = vmatprep.subr.bf16.mxu0 %v935
          %999 = vmatpush1.bf16.msra.mxu0 %v934
          %1000 = vmatprep.subr.bf16.mxu0 %v937
          %1001 = vmatpush1.bf16.msra.mxu0 %v936
          %1002 = vmatprep.subr.bf16.mxu0 %v939
          %1003 = vmatpush1.bf16.msra.mxu0 %v938
          %1004 = vmatprep.subr.bf16.mxu0 %v941
          %1005 = vmatpush1.bf16.msra.mxu0 %v940
          %1006 = vmatprep.subr.bf16.mxu0 %v943
          %1007 = vmatpush1.bf16.msra.mxu0 %v942
          %1008 = vmatprep.subr.bf16.mxu0 %v945
          %1009 = vmatpush1.bf16.msra.mxu0 %v944
          %1010 = vmatprep.subr.bf16.mxu0 %v947
          %1011 = vmatpush1.bf16.msra.mxu0 %v946
          %1012 = vmatprep.subr.bf16.mxu0 %v949
          %1013 = vmatpush1.bf16.msra.mxu0 %v948
          %1014 = vmatprep.subr.bf16.mxu0 %v951
          %1015 = vmatpush1.bf16.msra.mxu0 %v950
          %1016 = vmatprep.subr.bf16.mxu0 %v953
          %1017 = vmatpush1.bf16.msra.mxu0 %v952
          %1018 = vmatprep.subr.bf16.mxu0 %v955
          %1019 = vmatpush1.bf16.msra.mxu0 %v954
          %1020 = vmatprep.subr.bf16.mxu0 %v957
          %1021 = vmatpush1.bf16.msra.mxu0 %v956
          %1022 = vmatprep.subr.bf16.mxu0 %v959
          %1023 = vmatpush1.bf16.msra.mxu0 %v958
          %1024 = vmatprep.mubr.bf16.mxu0 %v781
          %1025 = vmatmul.mubr.bf16.gmra.mrb[0].mxu0 %v780
          %v1026 = vpop.f32.mrb[0].mxu0
          %v1027 = vadd.f32 %v825, %v1026
          %v1028 = vpop.f32.mrb[0].mxu0
          %v1029 = vadd.f32 %v829, %v1028
          %v1030 = vpop.f32.mrb[0].mxu0
          %v1031 = vadd.f32 %v825, %v1030
          %v1032 = vpop.f32.mrb[0].mxu0
          %v1033 = vadd.f32 %v829, %v1032
          %1034 = vmatprep.mubr.bf16.mxu0 %v783
          %1035 = vmatmul.mubr.bf16.gmra.mrb[0].mxu0 %v782
          %v1036 = vpop.f32.mrb[0].mxu0
          %v1037 = vadd.f32 %v825, %v1036
          %v1038 = vpop.f32.mrb[0].mxu0
          %v1039 = vadd.f32 %v829, %v1038
          %v1040 = vpop.f32.mrb[0].mxu0
          %v1041 = vadd.f32 %v825, %v1040
          %v1042 = vpop.f32.mrb[0].mxu0
          %v1043 = vadd.f32 %v829, %v1042
          %1044 = vmatprep.mubr.bf16.mxu0 %v785
          %1045 = vmatmul.mubr.bf16.gmra.mrb[0].mxu0 %v784
          %v1046 = vpop.f32.mrb[0].mxu0
          %v1047 = vadd.f32 %v825, %v1046
          %v1048 = vpop.f32.mrb[0].mxu0
          %v1049 = vadd.f32 %v829, %v1048
          %v1050 = vpop.f32.mrb[0].mxu0
          %v1051 = vadd.f32 %v825, %v1050
          %v1052 = vpop.f32.mrb[0].mxu0
          %v1053 = vadd.f32 %v829, %v1052
          %1054 = vmatprep.mubr.bf16.mxu0 %v787
          %1055 = vmatmul.mubr.bf16.gmra.mrb[0].mxu0 %v786
          %v1056 = vpop.f32.mrb[0].mxu0
          %v1057 = vadd.f32 %v825, %v1056
          %v1058 = vpop.f32.mrb[0].mxu0
          %v1059 = vadd.f32 %v829, %v1058
          %v1060 = vpop.f32.mrb[0].mxu0
          %v1061 = vadd.f32 %v825, %v1060
          %v1062 = vpop.f32.mrb[0].mxu0
          %v1063 = vadd.f32 %v829, %v1062
          %1064 = vdwg.mxu0
          %1065 = vst [vmem:[%s333] sm:$0xff] %v1027
          %1066 = vst [vmem:[%s333 + $0x8] sm:$0xff] %v1029
          %1067 = vst [vmem:[%s333 + $0x10] sm:$0xff] %v1031
          %1068 = vst [vmem:[%s333 + $0x18] sm:$0xff] %v1033
          %1069 = vst [vmem:[%s333 + $0x20] sm:$0xff] %v1037
          %1070 = vst [vmem:[%s333 + $0x28] sm:$0xff] %v1039
          %1071 = vst [vmem:[%s333 + $0x30] sm:$0xff] %v1041
          %1072 = vst [vmem:[%s333 + $0x38] sm:$0xff] %v1043
          %1073 = vst [vmem:[%s333 + $0x40] sm:$0xff] %v1047
          %1074 = vst [vmem:[%s333 + $0x48] sm:$0xff] %v1049
          %1075 = vst [vmem:[%s333 + $0x50] sm:$0xff] %v1051
          %1076 = vst [vmem:[%s333 + $0x58] sm:$0xff] %v1053
          %1077 = vst [vmem:[%s333 + $0x60] sm:$0xff] %v1057
          %1078 = vst [vmem:[%s333 + $0x68] sm:$0xff] %v1059
          %1079 = vst [vmem:[%s333 + $0x70] sm:$0xff] %v1061
          %1080 = vst [vmem:[%s333 + $0x78] sm:$0xff] %v1063
        $region86: #{encoder_forward.1} parent=73 // pred_fallthru
          _
        %s1081 = smul.u32 8, %s20
        %p1082 = scmp.lt.s32.totalorder %s1081, 23
        %s1083 = scalar_select %p1082, %s1081, 23
        %s1084 = smul.addr %s1083, 2
        %s1085 = smul.addr %s1084, 8
        %s1086 = scalar_lea.vmem %s5, %s1085
        // Predicated region
        $region87: #{encoder_forward.1} parent=73 // pred_check
          %p1087 = pneg %p163
        $region88: #{encoder_forward.1} parent=73 // pred_check_branch
          %1089 = sbr.rel (%p1087) target = $region90
        $region89: #{encoder_forward.1} parent=73 // pred_region
          %s1090 = smul.u32 8, %s20
        $region90: #{encoder_forward.1} parent=73 // pred_fallthru
          _
      $region74: #{encoder_forward.1} parent=5 // pred_fallthru
        _
      %p1091 = scmp.le.s32.totalorder 2, %s11
      // Predicated region
      $region91: #{encoder_forward.1} parent=5 // pred_check
        %p1092 = pneg %p1091
      $region92: #{encoder_forward.1} parent=5 // pred_check_branch
        %1094 = sbr.rel (%p1092) target = $region94
      $region93: #{encoder_forward.1} parent=5 // pred_region
        %s1095 = ssub.s32 %s11, 2
        // Predicated region
        $region95: #{encoder_forward.1} parent=93 // pred_check
          %p1096 = pneg %p169
        $region96: #{encoder_forward.1} parent=93 // pred_check_branch
          %1098 = sbr.rel (%p1096) target = $region98
        $region97: #{encoder_forward.1} parent=93 // pred_region
          %s1099 = smul.u32 8, %s22
          %p1100 = scmp.lt.s32.totalorder %s1099, 23
          %s1101 = scalar_select %p1100, %s1099, 23
          %s1102 = smul.addr %s1101, 2
          %s1103 = smul.addr %s1102, 8
          %s1104 = scalar_lea.vmem %s5, %s1103
        $region98: #{encoder_forward.1} parent=93 // pred_fallthru
          _
      $region94: #{encoder_forward.1} parent=5 // pred_fallthru
        _
    $region6: #{encoder_forward.1} parent=1 // loop_footer
      %s15 = sadd.s32 1, %s11
    $region7: #{encoder_forward.1} parent=1 // loop_footer_branch
      %10 = sbr.rel target = $region3
    $region8: #{encoder_forward.1} parent=1 // loop_exit
      _

</llo_original>
